<compile_context>
chip_gen: v5e
topology: v5e:2x2
jax: 0.10.0
libtpu: 0.0.40
codegen_flags: <defaults>
</compile_context>

<pallas_src>
import jax
import jax.numpy as jnp
from jax.experimental import pallas as pl
from jax.experimental.pallas import tpu as pltpu


def mlp_kernel(x_ref,
               w0_ref, b0_ref,
               w1_ref, b1_ref,
               w2_ref, b2_ref,
               w3_ref, b3_ref,
               w4_ref, b4_ref,
               o_ref):
    """One batch tile: 4x (Linear -> Dropout(eval)=id -> ReLU) -> Linear -> softmax."""
    h = x_ref[...]

    # Hidden layers: Linear + ReLU (Dropout is identity at inference).
    # Matmuls accumulate in f32 on the MXU; bias-add / ReLU stay f32 on the VPU.
    h = jnp.maximum(
        jnp.dot(h, w0_ref[...], preferred_element_type=jnp.float32) + b0_ref[...], 0.0)
    h = jnp.maximum(
        jnp.dot(h, w1_ref[...], preferred_element_type=jnp.float32) + b1_ref[...], 0.0)
    h = jnp.maximum(
        jnp.dot(h, w2_ref[...], preferred_element_type=jnp.float32) + b2_ref[...], 0.0)
    h = jnp.maximum(
        jnp.dot(h, w3_ref[...], preferred_element_type=jnp.float32) + b3_ref[...], 0.0)

    # Output layer + row softmax.  The output block is compact (out_dim lanes),
    # so HBM writeback is minimal; the softmax divide is exact so rows sum to 1
    # to f32 precision.
    logits = jnp.dot(h, w4_ref[...], preferred_element_type=jnp.float32) + b4_ref[...]
    m = jnp.max(logits, axis=1, keepdims=True)
    e = jnp.exp(logits - m)
    denom = jnp.sum(e, axis=1, keepdims=True)
    o_ref[...] = (e / denom).astype(o_ref.dtype)

    # TODO(synk): training-mode dropout (inverted dropout with pltpu PRNG) is not
    # implemented; eval-mode forward (dropout == identity) is reproduced exactly.


def _round_up(n, m):
    return ((n + m - 1) // m) * m


def _vmem_budget_and_limit():
    """Generation-aware (budget_bytes, vmem_limit_bytes).

    v5e/v6e have 128 MiB physical VMEM, v7x has 64 MiB; default scoped limits
    are 16/32/32 MiB, so we request an explicit vmem_limit_bytes sized to the
    budget.  Falls back to conservative values when the query is unavailable
    (e.g. interpret mode on CPU, where the limit is ignored anyway).
    """
    try:
        cap = int(getattr(pltpu.get_tpu_info(), "vmem_capacity_bytes", 0)) or None
    except Exception:
        cap = None
    if cap is None:
        # 48 MiB scoped request is safe on every generation (v7x physical = 64 MiB).
        return 20 << 20, 48 << 20
    budget = max(12 << 20, min(int(cap * 0.45), 56 << 20))
    limit = min(int(cap * 0.75), budget + (16 << 20))
    return budget, limit


def _choose_tile_b(batch_rows8, input_dim, hidden_pad, out_dim, weight_bytes,
                   x_itemsize, budget_bytes, max_tile=1024, min_grid_steps=4):
    """Pick a batch tile: as large as the VMEM budget allows, but capped so the
    grid keeps >= min_grid_steps steps (pipelining + 2-TC sharding on v7x)."""
    # Weights/biases are budgeted double-buffered (Pallas default, even with a
    # constant index_map); the remainder of the budget feeds the batch tile.
    avail = max(budget_bytes - 2 * weight_bytes, 1 << 20)
    per_row = (2 * input_dim * x_itemsize          # double-buffered x block
               + 2 * out_dim * 4                   # double-buffered out block
               + (sum(hidden_pad) + out_dim) * 4)  # live f32 activations/logits
    per_row = int(per_row * 1.25) + 64             # layout / relayout slack
    tile = max_tile
    while tile > 8 and tile * per_row > avail:
        tile //= 2
    tile = max(tile, 8)
    # Keep the grid >= min_grid_steps when the batch is big enough so the batch
    # axis actually double-buffers and shards across both v7x TensorCores.
    if batch_rows8 >= min_grid_steps * 8:
        tile = min(tile, max(8, (batch_rows8 // min_grid_steps) // 8 * 8))
    return min(tile, batch_rows8)


def mlp_forward(x, params, *, max_tile_b=1024, first_layer_bf16=None, interpret=False):
    """Fused scaden-MLP forward (eval mode).

    x: (B, input_dim) f32.
    params: list of 5 (W, b) pairs with W: (in, out), b: (1, out).
    Returns (B, output_dim) f32, softmax over dim=1.
    """
    assert len(params) == 5, "scaden MLP = 4 hidden layers + output layer"
    B, input_dim = x.shape
    out_dim = params[-1][0].shape[1]

    # --- Pad hidden feature dims up to 128 lanes with zero weight cols/rows and
    # zero bias.  Exactly correctness-preserving: ReLU(0 + 0) = 0 in the padded
    # lanes and those activations then multiply zero weight rows in the next
    # layer.  The final layer's output stays compact (out_dim columns) so the
    # HBM write stream is not inflated. ---
    padded = []
    prev_pad = 0
    for li, (w, b) in enumerate(params):
        is_last = li == len(params) - 1
        out_f = w.shape[1]
        out_pad_amt = 0 if is_last else _round_up(out_f, 128) - out_f
        w = jnp.pad(w, ((0, prev_pad), (0, out_pad_amt)))
        b = jnp.pad(b, ((0, 0), (0, out_pad_amt)))
        padded.append((w, b))
        prev_pad = out_pad_amt

    # --- Optional bf16 at the HBM boundary for the (dominant) x / W0 streams
    # when input_dim is large (realistic scaden: thousands of genes).  Bias add
    # and all later math stay f32 (v5e VPU has no bf16). ---
    if first_layer_bf16 is None:
        first_layer_bf16 = input_dim >= 1024
    if first_layer_bf16:
        x = x.astype(jnp.bfloat16)
        w0, b0 = padded[0]
        padded[0] = (w0.astype(jnp.bfloat16), b0)

    hidden_pad = [w.shape[1] for w, _ in padded[:-1]]
    weight_bytes = sum(int(w.size) * w.dtype.itemsize + int(b.size) * b.dtype.itemsize
                       for w, b in padded)

    # --- Generation-aware VMEM budget, batch tiling & padding. ---
    budget_bytes, vmem_limit = _vmem_budget_and_limit()
    rows8 = _round_up(B, 8)
    tile_b = _choose_tile_b(rows8, input_dim, hidden_pad, out_dim, weight_bytes,
                            x.dtype.itemsize, budget_bytes, max_tile=max_tile_b)
    b_pad = _round_up(B, tile_b)
    if b_pad != B:
        x = jnp.pad(x, ((0, b_pad - B), (0, 0)))

    # x / out move with the batch grid index; weights & biases stay resident in
    # VMEM across all grid steps (constant block index).  NOTE: they still get
    # the default double buffers — accounted for in the budget above rather
    # than risking pipeline_mode=Buffered(1) support differences.
    flat = []
    in_specs = [pl.BlockSpec((tile_b, input_dim), lambda i: (i, 0))]
    for (w, b) in padded:
        flat += [w, b]
        in_specs.append(pl.BlockSpec(w.shape, lambda i: (0, 0)))
        in_specs.append(pl.BlockSpec(b.shape, lambda i: (0, 0)))

    out = pl.pallas_call(
        mlp_kernel,
        out_shape=jax.ShapeDtypeStruct((b_pad, out_dim), jnp.float32),
        grid=(b_pad // tile_b,),
        in_specs=in_specs,
        out_specs=pl.BlockSpec((tile_b, out_dim), lambda i: (i, 0)),
        compiler_params=pltpu.CompilerParams(
            dimension_semantics=("parallel",),   # batch axis: 2-TC sharding on v7x
            vmem_limit_bytes=vmem_limit),
        interpret=interpret,
    )(x, *flat)

    # Strip batch padding (output columns are already compact).
    return out[:B, :]


def init_params(key, input_dim, hidden_units, output_dim):
    """Deterministic init mirroring nn.Linear shapes (stored transposed: (in, out))."""
    dims = [input_dim] + list(hidden_units) + [output_dim]
    params = []
    for i in range(len(dims) - 1):
        fan_in, fan_out = dims[i], dims[i + 1]
        key, kw, kb = jax.random.split(key, 3)
        bound = 1.0 / jnp.sqrt(fan_in)
        w = jax.random.uniform(kw, (fan_in, fan_out), jnp.float32, -bound, bound)
        b = jax.random.uniform(kb, (1, fan_out), jnp.float32, -bound, bound)
        params.append((w, b))
    return params


if __name__ == "__main__":
    key = jax.random.PRNGKey(0)

    batch = 64                      # big enough to exercise a multi-step grid
    input_dim = 32
    hidden_units = [64, 32, 16, 16]
    output_dim = 8

    key, kx = jax.random.split(key)
    x = jax.random.normal(kx, (batch, input_dim), jnp.float32)
    params = init_params(key, input_dim, hidden_units, output_dim)

    out = jax.block_until_ready(mlp_forward(x, params))

    # Pure-JAX reference (eval mode: dropout = identity).
    h = x
    for w, b in params[:-1]:
        h = jnp.maximum(h @ w + b, 0.0)
    ref = jax.nn.softmax(h @ params[-1][0] + params[-1][1], axis=1)

    assert out.shape == (batch, output_dim)
    # Exact softmax normalization inside the kernel -> rows sum to 1 to f32 precision.
    assert bool(jnp.allclose(jnp.sum(out, axis=1), 1.0, atol=1e-4)), "rows must sum to 1"
    max_err = float(jnp.max(jnp.abs(out - ref)))
    assert max_err < 2e-3, f"max abs err vs reference: {max_err}"

    print("KERNEL_OK")
</pallas_src>

<mosaic_0001>
module attributes {stable_mosaic.version = 11 : i64} {
  func.func @mlp_kernel(%arg0: i32, %arg1: memref<16x32xf32, #tpu.memory_space<vmem>>, %arg2: memref<32x128xf32, #tpu.memory_space<vmem>>, %arg3: memref<1x128xf32, #tpu.memory_space<vmem>>, %arg4: memref<128x128xf32, #tpu.memory_space<vmem>>, %arg5: memref<1x128xf32, #tpu.memory_space<vmem>>, %arg6: memref<128x128xf32, #tpu.memory_space<vmem>>, %arg7: memref<1x128xf32, #tpu.memory_space<vmem>>, %arg8: memref<128x128xf32, #tpu.memory_space<vmem>>, %arg9: memref<1x128xf32, #tpu.memory_space<vmem>>, %arg10: memref<128x8xf32, #tpu.memory_space<vmem>>, %arg11: memref<1x8xf32, #tpu.memory_space<vmem>>, %arg12: memref<16x8xf32, #tpu.memory_space<vmem>>) attributes {dimension_semantics = [#tpu.dimension_semantics<parallel>], iteration_bounds = array<i64: 4>, scalar_prefetch = 0 : i64, scratch_operands = 0 : i64, tpu.core_type = #tpu.core_type<tc>, window_params = [{transform_indices = @transform_0, window_bounds = array<i64: 16, 32>}, {pipeline_mode = #tpu.pipeline_mode<synchronous>, transform_indices = @transform_1, window_bounds = array<i64: 32, 128>}, {pipeline_mode = #tpu.pipeline_mode<synchronous>, transform_indices = @transform_2, window_bounds = array<i64: 1, 128>}, {pipeline_mode = #tpu.pipeline_mode<synchronous>, transform_indices = @transform_3, window_bounds = array<i64: 128, 128>}, {pipeline_mode = #tpu.pipeline_mode<synchronous>, transform_indices = @transform_4, window_bounds = array<i64: 1, 128>}, {pipeline_mode = #tpu.pipeline_mode<synchronous>, transform_indices = @transform_5, window_bounds = array<i64: 128, 128>}, {pipeline_mode = #tpu.pipeline_mode<synchronous>, transform_indices = @transform_6, window_bounds = array<i64: 1, 128>}, {pipeline_mode = #tpu.pipeline_mode<synchronous>, transform_indices = @transform_7, window_bounds = array<i64: 128, 128>}, {pipeline_mode = #tpu.pipeline_mode<synchronous>, transform_indices = @transform_8, window_bounds = array<i64: 1, 128>}, {pipeline_mode = #tpu.pipeline_mode<synchronous>, transform_indices = @transform_9, window_bounds = array<i64: 128, 8>}, {pipeline_mode = #tpu.pipeline_mode<synchronous>, transform_indices = @transform_10, window_bounds = array<i64: 1, 8>}, {transform_indices = @transform_11, window_bounds = array<i64: 16, 8>}]} {
    %c0 = arith.constant 0 : index
    %c0_0 = arith.constant 0 : index
    %0 = vector.load %arg1[%c0, %c0_0] : memref<16x32xf32, #tpu.memory_space<vmem>>, vector<16x32xf32>
    %c0_1 = arith.constant 0 : index
    %c0_2 = arith.constant 0 : index
    %1 = vector.load %arg2[%c0_1, %c0_2] : memref<32x128xf32, #tpu.memory_space<vmem>>, vector<32x128xf32>
    %cst = arith.constant dense<0.000000e+00> : vector<16x128xf32>
    %2 = tpu.matmul %0, %1, %cst {dimension_numbers = #tpu.dot_dimension_numbers<[1], [0], [0], [1], [0, 0, 1, 1], [], []>} : vector<16x32xf32>, vector<32x128xf32>, vector<16x128xf32> -> vector<16x128xf32>
    %c0_3 = arith.constant 0 : index
    %c0_4 = arith.constant 0 : index
    %3 = vector.load %arg3[%c0_3, %c0_4] : memref<1x128xf32, #tpu.memory_space<vmem>>, vector<1x128xf32>
    %4 = vector.broadcast %3 : vector<1x128xf32> to vector<16x128xf32>
    %5 = arith.addf %2, %4 : vector<16x128xf32>
    %cst_5 = arith.constant 0.000000e+00 : f32
    %6 = vector.broadcast %cst_5 : f32 to vector<16x128xf32>
    %7 = arith.maximumf %5, %6 : vector<16x128xf32>
    %c0_6 = arith.constant 0 : index
    %c0_7 = arith.constant 0 : index
    %8 = vector.load %arg4[%c0_6, %c0_7] : memref<128x128xf32, #tpu.memory_space<vmem>>, vector<128x128xf32>
    %cst_8 = arith.constant dense<0.000000e+00> : vector<16x128xf32>
    %9 = tpu.matmul %7, %8, %cst_8 {dimension_numbers = #tpu.dot_dimension_numbers<[1], [0], [0], [1], [0, 0, 1, 1], [], []>} : vector<16x128xf32>, vector<128x128xf32>, vector<16x128xf32> -> vector<16x128xf32>
    %c0_9 = arith.constant 0 : index
    %c0_10 = arith.constant 0 : index
    %10 = vector.load %arg5[%c0_9, %c0_10] : memref<1x128xf32, #tpu.memory_space<vmem>>, vector<1x128xf32>
    %11 = vector.broadcast %10 : vector<1x128xf32> to vector<16x128xf32>
    %12 = arith.addf %9, %11 : vector<16x128xf32>
    %cst_11 = arith.constant 0.000000e+00 : f32
    %13 = vector.broadcast %cst_11 : f32 to vector<16x128xf32>
    %14 = arith.maximumf %12, %13 : vector<16x128xf32>
    %c0_12 = arith.constant 0 : index
    %c0_13 = arith.constant 0 : index
    %15 = vector.load %arg6[%c0_12, %c0_13] : memref<128x128xf32, #tpu.memory_space<vmem>>, vector<128x128xf32>
    %cst_14 = arith.constant dense<0.000000e+00> : vector<16x128xf32>
    %16 = tpu.matmul %14, %15, %cst_14 {dimension_numbers = #tpu.dot_dimension_numbers<[1], [0], [0], [1], [0, 0, 1, 1], [], []>} : vector<16x128xf32>, vector<128x128xf32>, vector<16x128xf32> -> vector<16x128xf32>
    %c0_15 = arith.constant 0 : index
    %c0_16 = arith.constant 0 : index
    %17 = vector.load %arg7[%c0_15, %c0_16] : memref<1x128xf32, #tpu.memory_space<vmem>>, vector<1x128xf32>
    %18 = vector.broadcast %17 : vector<1x128xf32> to vector<16x128xf32>
    %19 = arith.addf %16, %18 : vector<16x128xf32>
    %cst_17 = arith.constant 0.000000e+00 : f32
    %20 = vector.broadcast %cst_17 : f32 to vector<16x128xf32>
    %21 = arith.maximumf %19, %20 : vector<16x128xf32>
    %c0_18 = arith.constant 0 : index
    %c0_19 = arith.constant 0 : index
    %22 = vector.load %arg8[%c0_18, %c0_19] : memref<128x128xf32, #tpu.memory_space<vmem>>, vector<128x128xf32>
    %cst_20 = arith.constant dense<0.000000e+00> : vector<16x128xf32>
    %23 = tpu.matmul %21, %22, %cst_20 {dimension_numbers = #tpu.dot_dimension_numbers<[1], [0], [0], [1], [0, 0, 1, 1], [], []>} : vector<16x128xf32>, vector<128x128xf32>, vector<16x128xf32> -> vector<16x128xf32>
    %c0_21 = arith.constant 0 : index
    %c0_22 = arith.constant 0 : index
    %24 = vector.load %arg9[%c0_21, %c0_22] : memref<1x128xf32, #tpu.memory_space<vmem>>, vector<1x128xf32>
    %25 = vector.broadcast %24 : vector<1x128xf32> to vector<16x128xf32>
    %26 = arith.addf %23, %25 : vector<16x128xf32>
    %cst_23 = arith.constant 0.000000e+00 : f32
    %27 = vector.broadcast %cst_23 : f32 to vector<16x128xf32>
    %28 = arith.maximumf %26, %27 : vector<16x128xf32>
    %c0_24 = arith.constant 0 : index
    %c0_25 = arith.constant 0 : index
    %29 = vector.load %arg10[%c0_24, %c0_25] : memref<128x8xf32, #tpu.memory_space<vmem>>, vector<128x8xf32>
    %cst_26 = arith.constant dense<0.000000e+00> : vector<16x8xf32>
    %30 = tpu.matmul %28, %29, %cst_26 {dimension_numbers = #tpu.dot_dimension_numbers<[1], [0], [0], [1], [0, 0, 1, 1], [], []>} : vector<16x128xf32>, vector<128x8xf32>, vector<16x8xf32> -> vector<16x8xf32>
    %c0_27 = arith.constant 0 : index
    %c0_28 = arith.constant 0 : index
    %31 = vector.load %arg11[%c0_27, %c0_28] : memref<1x8xf32, #tpu.memory_space<vmem>>, vector<1x8xf32>
    %32 = vector.broadcast %31 : vector<1x8xf32> to vector<16x8xf32>
    %33 = arith.addf %30, %32 : vector<16x8xf32>
    %cst_29 = arith.constant dense<0xFF800000> : vector<16xf32>
    %34 = vector.multi_reduction <maximumf>, %33, %cst_29 [1] : vector<16x8xf32> to vector<16xf32>
    %35 = vector.shape_cast %34 : vector<16xf32> to vector<16x1xf32>
    %36 = vector.broadcast %35 : vector<16x1xf32> to vector<16x8xf32>
    %37 = arith.subf %33, %36 : vector<16x8xf32>
    %38 = math.exp %37 : vector<16x8xf32>
    %cst_30 = arith.constant dense<0.000000e+00> : vector<16xf32>
    %39 = vector.multi_reduction <add>, %38, %cst_30 [1] : vector<16x8xf32> to vector<16xf32>
    %40 = vector.shape_cast %39 : vector<16xf32> to vector<16x1xf32>
    %41 = vector.broadcast %40 : vector<16x1xf32> to vector<16x8xf32>
    %42 = arith.divf %38, %41 : vector<16x8xf32>
    %c0_31 = arith.constant 0 : index
    %c0_32 = arith.constant 0 : index
    %43 = vector.load %arg12[%c0_31, %c0_32] : memref<16x8xf32, #tpu.memory_space<vmem>>, vector<16x8xf32>
    tpu.vector_store %arg12[%c0_31, %c0_32], %42 {strides = array<i32>} : memref<16x8xf32, #tpu.memory_space<vmem>>, vector<16x8xf32>,
    return
  }
  func.func @transform_0(%arg0: i32) -> (i32, i32) {
    %c0_i32 = arith.constant 0 : i32
    %c0_i32_0 = arith.constant 0 : i32
    return %arg0, %c0_i32 : i32, i32
  }
  func.func @transform_1(%arg0: i32) -> (i32, i32) {
    %c0_i32 = arith.constant 0 : i32
    %c0_i32_0 = arith.constant 0 : i32
    %c0_i32_1 = arith.constant 0 : i32
    return %c0_i32, %c0_i32_0 : i32, i32
  }
  func.func @transform_2(%arg0: i32) -> (i32, i32) {
    %c0_i32 = arith.constant 0 : i32
    %c0_i32_0 = arith.constant 0 : i32
    %c0_i32_1 = arith.constant 0 : i32
    return %c0_i32, %c0_i32_0 : i32, i32
  }
  func.func @transform_3(%arg0: i32) -> (i32, i32) {
    %c0_i32 = arith.constant 0 : i32
    %c0_i32_0 = arith.constant 0 : i32
    %c0_i32_1 = arith.constant 0 : i32
    return %c0_i32, %c0_i32_0 : i32, i32
  }
  func.func @transform_4(%arg0: i32) -> (i32, i32) {
    %c0_i32 = arith.constant 0 : i32
    %c0_i32_0 = arith.constant 0 : i32
    %c0_i32_1 = arith.constant 0 : i32
    return %c0_i32, %c0_i32_0 : i32, i32
  }
  func.func @transform_5(%arg0: i32) -> (i32, i32) {
    %c0_i32 = arith.constant 0 : i32
    %c0_i32_0 = arith.constant 0 : i32
    %c0_i32_1 = arith.constant 0 : i32
    return %c0_i32, %c0_i32_0 : i32, i32
  }
  func.func @transform_6(%arg0: i32) -> (i32, i32) {
    %c0_i32 = arith.constant 0 : i32
    %c0_i32_0 = arith.constant 0 : i32
    %c0_i32_1 = arith.constant 0 : i32
    return %c0_i32, %c0_i32_0 : i32, i32
  }
  func.func @transform_7(%arg0: i32) -> (i32, i32) {
    %c0_i32 = arith.constant 0 : i32
    %c0_i32_0 = arith.constant 0 : i32
    %c0_i32_1 = arith.constant 0 : i32
    return %c0_i32, %c0_i32_0 : i32, i32
  }
  func.func @transform_8(%arg0: i32) -> (i32, i32) {
    %c0_i32 = arith.constant 0 : i32
    %c0_i32_0 = arith.constant 0 : i32
    %c0_i32_1 = arith.constant 0 : i32
    return %c0_i32, %c0_i32_0 : i32, i32
  }
  func.func @transform_9(%arg0: i32) -> (i32, i32) {
    %c0_i32 = arith.constant 0 : i32
    %c0_i32_0 = arith.constant 0 : i32
    %c0_i32_1 = arith.constant 0 : i32
    return %c0_i32, %c0_i32_0 : i32, i32
  }
  func.func @transform_10(%arg0: i32) -> (i32, i32) {
    %c0_i32 = arith.constant 0 : i32
    %c0_i32_0 = arith.constant 0 : i32
    %c0_i32_1 = arith.constant 0 : i32
    return %c0_i32, %c0_i32_0 : i32, i32
  }
  func.func @transform_11(%arg0: i32) -> (i32, i32) {
    %c0_i32 = arith.constant 0 : i32
    %c0_i32_0 = arith.constant 0 : i32
    return %arg0, %c0_i32 : i32, i32
  }
}

</mosaic_0001>

<llo_original>
// kernel: tpu_custom_call.1
$region0: #{tpu_custom_call.1}
  #allocation0 [shape = 'u32[]', space=smem, size = 0x4, offset = 0x4, fixed_abs, tag = 'smem constant byte address 0x4 - core index']
  #allocation1 [shape = 'u32[72,128]{1,0:T(1,128)}', space=vmem, size = 0x9000, scoped, tag = 'internal scratch']
  %s0 = inlined_call_operand.vmem [shape: f32[64,32], index: 0, kind: input, shape index: {}]
  %s1 = inlined_call_operand.vmem [shape: f32[32,128], index: 1, kind: input, shape index: {}]
  %s2 = inlined_call_operand.vmem [shape: f32[1,128], index: 2, kind: input, shape index: {}]
  %s3 = inlined_call_operand.vmem [shape: f32[128,128], index: 3, kind: input, shape index: {}]
  %s4 = inlined_call_operand.vmem [shape: f32[1,128], index: 4, kind: input, shape index: {}]
  %s5 = inlined_call_operand.hbm [shape: f32[128,128], index: 5, kind: input, shape index: {}]
  %s6 = inlined_call_operand.vmem [shape: f32[1,128], index: 6, kind: input, shape index: {}]
  %s7 = inlined_call_operand.hbm [shape: f32[128,128], index: 7, kind: input, shape index: {}]
  %s8 = inlined_call_operand.vmem [shape: f32[1,128], index: 8, kind: input, shape index: {}]
  %s9 = inlined_call_operand.vmem [shape: f32[128,8], index: 9, kind: input, shape index: {}]
  %s10 = inlined_call_operand.vmem [shape: f32[1,8], index: 10, kind: input, shape index: {}]
  %s11 = inlined_call_operand.vmem [shape: f32[64,8], index: 11, kind: output, shape index: {}]
  %s12 = sld [smem:[#allocation0]]
  $region85: #{tpu_custom_call.1} parent=0
    _
  %s14 = ssub.s32 1, %s12
  %s15 = scalar_select 0, %s14, %s12
  $region1: #{tpu_custom_call.1} parent=0
    #allocation2 [shape = 'u8[65536]{0}', space=vmem, size = 0x10000, scoped, tag = 'input window, operand 5, single buffered']
    #allocation3 [shape = 's32[2]{0}', space=sflag, size = 0x8, scoped, tag = 'scoped memory for tpu_custom_call.1']
    #allocation4 [shape = 'u8[65536]{0}', space=vmem, size = 0x10000, scoped, tag = 'input window, operand 7, single buffered']
    #allocation5 [shape = 's32[1]{0}', space=sflag, size = 0x4, scoped, tag = 'scoped memory for tpu_custom_call.1']
    %16 = vsyncpa [#allocation3], 0
    %17 = vsyncpa [#allocation5], 0
    loop: start=0, step=1, limit=6
    $region2: #{tpu_custom_call.1} parent=1 // loop_pre_header
      _
    $region3: #{tpu_custom_call.1} parent=1 // loop_header
      %s19 = sphi 0, %s23
      %p20 = scmp.ge.s32.totalorder %s19, 6
      %s29 = sphi 0, %s31
      %s32 = sphi 0, %s29
      %s33 = sphi 0, %s32
      %s49 = sphi 0, %s33
      %s53 = sphi 0, %s53
      %s55 = sphi 0, %s53
      %s56 = sphi 0, %s55
      %s70 = sphi 0, %s56
      %s74 = sphi 0, %s74
      %s76 = sphi 0, %s74
      %s77 = sphi 0, %s76
      %s91 = sphi 0, %s77
      %s95 = sphi 0, %s95
      %s97 = sphi 0, %s95
      %s98 = sphi 0, %s97
      %s112 = sphi 0, %s98
      %s116 = sphi 0, %s116
      %s118 = sphi 0, %s116
      %s119 = sphi 0, %s118
      %s133 = sphi 0, %s119
      %s137 = sphi 0, %s137
      %s139 = sphi 0, %s137
      %s140 = sphi 0, %s139
      %s154 = sphi 0, %s140
      %s158 = sphi 0, %s158
      %s160 = sphi 0, %s158
      %s161 = sphi 0, %s160
      %s175 = sphi 0, %s161
      %s179 = sphi 0, %s179
      %s181 = sphi 0, %s179
      %s182 = sphi 0, %s181
      %s196 = sphi 0, %s182
      %s200 = sphi 0, %s200
      %s202 = sphi 0, %s200
      %s203 = sphi 0, %s202
      %s217 = sphi 0, %s203
      %s221 = sphi 0, %s221
      %s223 = sphi 0, %s221
      %s224 = sphi 0, %s223
      %s238 = sphi 0, %s224
      %s242 = sphi 0, %s242
      %s244 = sphi 0, %s242
      %s245 = sphi 0, %s244
      %s259 = sphi 0, %s245
      %s265 = sphi 0, %s267
      %s268 = sphi 0, %s265
      %s269 = sphi 0, %s268
      %s285 = sphi 0, %s269
    $region4: #{tpu_custom_call.1} parent=1 // loop_header_branch
      %22 = sbr.rel (%p20) target = $region8
    $region5: #{tpu_custom_call.1} parent=1 // loop_body
      %s24 = ssub.s32 %s19, 1
      %s25 = ssub.s32 %s19, 2
      %s26 = sadd.s32 %s19, 1
      %s27 = ssub.s32 %s19, %s26
      %p28 = scmp.eq.s32.totalorder %s27, 0
      %s30 = sadd.s32 %s29, 1
      %s31 = scalar_select %p28, %s29, %s30
      %p34 = pneg %p28
      %p35 = scmp.eq.s32.totalorder %s19, 3
      %p36 = por %p34, %p35
      %p37 = scmp.ne.s32.totalorder %s29, %s32
      %p38 = scmp.eq.s32.totalorder %s19, 0
      %p39 = por %p37, %p38
      %p40 = scmp.ne.s32.totalorder %s29, %s32
      %p41 = scmp.eq.s32.totalorder %s24, 3
      %p42 = por %p40, %p41
      %p43 = scmp.ne.s32.totalorder %s32, %s33
      %p44 = scmp.eq.s32.totalorder %s24, 0
      %p45 = por %p43, %p44
      %p46 = scmp.ne.s32.totalorder %s32, %s33
      %p47 = scmp.eq.s32.totalorder %s25, 3
      %p48 = por %p46, %p47
      %p50 = scmp.ne.s32.totalorder %s33, %s49
      %p51 = scmp.eq.s32.totalorder %s25, 0
      %p52 = por %p50, %p51
      %s54 = sadd.s32 %s53, 1
      %p57 = scmp.eq.s32.totalorder %s19, 3
      %p58 = scmp.ne.s32.totalorder %s53, %s55
      %p59 = scmp.eq.s32.totalorder %s19, 0
      %p60 = por %p58, %p59
      %p61 = scmp.ne.s32.totalorder %s53, %s55
      %p62 = scmp.eq.s32.totalorder %s24, 3
      %p63 = por %p61, %p62
      %p64 = scmp.ne.s32.totalorder %s55, %s56
      %p65 = scmp.eq.s32.totalorder %s24, 0
      %p66 = por %p64, %p65
      %p67 = scmp.ne.s32.totalorder %s55, %s56
      %p68 = scmp.eq.s32.totalorder %s25, 3
      %p69 = por %p67, %p68
      %p71 = scmp.ne.s32.totalorder %s56, %s70
      %p72 = scmp.eq.s32.totalorder %s25, 0
      %p73 = por %p71, %p72
      %s75 = sadd.s32 %s74, 1
      %p78 = scmp.eq.s32.totalorder %s19, 3
      %p79 = scmp.ne.s32.totalorder %s74, %s76
      %p80 = scmp.eq.s32.totalorder %s19, 0
      %p81 = por %p79, %p80
      %p82 = scmp.ne.s32.totalorder %s74, %s76
      %p83 = scmp.eq.s32.totalorder %s24, 3
      %p84 = por %p82, %p83
      %p85 = scmp.ne.s32.totalorder %s76, %s77
      %p86 = scmp.eq.s32.totalorder %s24, 0
      %p87 = por %p85, %p86
      %p88 = scmp.ne.s32.totalorder %s76, %s77
      %p89 = scmp.eq.s32.totalorder %s25, 3
      %p90 = por %p88, %p89
      %p92 = scmp.ne.s32.totalorder %s77, %s91
      %p93 = scmp.eq.s32.totalorder %s25, 0
      %p94 = por %p92, %p93
      %s96 = sadd.s32 %s95, 1
      %p99 = scmp.eq.s32.totalorder %s19, 3
      %p100 = scmp.ne.s32.totalorder %s95, %s97
      %p101 = scmp.eq.s32.totalorder %s19, 0
      %p102 = por %p100, %p101
      %p103 = scmp.ne.s32.totalorder %s95, %s97
      %p104 = scmp.eq.s32.totalorder %s24, 3
      %p105 = por %p103, %p104
      %p106 = scmp.ne.s32.totalorder %s97, %s98
      %p107 = scmp.eq.s32.totalorder %s24, 0
      %p108 = por %p106, %p107
      %p109 = scmp.ne.s32.totalorder %s97, %s98
      %p110 = scmp.eq.s32.totalorder %s25, 3
      %p111 = por %p109, %p110
      %p113 = scmp.ne.s32.totalorder %s98, %s112
      %p114 = scmp.eq.s32.totalorder %s25, 0
      %p115 = por %p113, %p114
      %s117 = sadd.s32 %s116, 1
      %p120 = scmp.eq.s32.totalorder %s19, 3
      %p121 = scmp.ne.s32.totalorder %s116, %s118
      %p122 = scmp.eq.s32.totalorder %s19, 0
      %p123 = por %p121, %p122
      %p124 = scmp.ne.s32.totalorder %s116, %s118
      %p125 = scmp.eq.s32.totalorder %s24, 3
      %p126 = por %p124, %p125
      %p127 = scmp.ne.s32.totalorder %s118, %s119
      %p128 = scmp.eq.s32.totalorder %s24, 0
      %p129 = por %p127, %p128
      %p130 = scmp.ne.s32.totalorder %s118, %s119
      %p131 = scmp.eq.s32.totalorder %s25, 3
      %p132 = por %p130, %p131
      %p134 = scmp.ne.s32.totalorder %s119, %s133
      %p135 = scmp.eq.s32.totalorder %s25, 0
      %p136 = por %p134, %p135
      %s138 = sadd.s32 %s137, 1
      %p141 = scmp.eq.s32.totalorder %s19, 3
      %p142 = scmp.ne.s32.totalorder %s137, %s139
      %p143 = scmp.eq.s32.totalorder %s19, 0
      %p144 = por %p142, %p143
      %p145 = scmp.ne.s32.totalorder %s137, %s139
      %p146 = scmp.eq.s32.totalorder %s24, 3
      %p147 = por %p145, %p146
      %p148 = scmp.ne.s32.totalorder %s139, %s140
      %p149 = scmp.eq.s32.totalorder %s24, 0
      %p150 = por %p148, %p149
      %p151 = scmp.ne.s32.totalorder %s139, %s140
      %p152 = scmp.eq.s32.totalorder %s25, 3
      %p153 = por %p151, %p152
      %p155 = scmp.ne.s32.totalorder %s140, %s154
      %p156 = scmp.eq.s32.totalorder %s25, 0
      %p157 = por %p155, %p156
      %s159 = sadd.s32 %s158, 1
      %p162 = scmp.eq.s32.totalorder %s19, 3
      %p163 = scmp.ne.s32.totalorder %s158, %s160
      %p164 = scmp.eq.s32.totalorder %s19, 0
      %p165 = por %p163, %p164
      %p166 = scmp.ne.s32.totalorder %s158, %s160
      %p167 = scmp.eq.s32.totalorder %s24, 3
      %p168 = por %p166, %p167
      %p169 = scmp.ne.s32.totalorder %s160, %s161
      %p170 = scmp.eq.s32.totalorder %s24, 0
      %p171 = por %p169, %p170
      %p172 = scmp.ne.s32.totalorder %s160, %s161
      %p173 = scmp.eq.s32.totalorder %s25, 3
      %p174 = por %p172, %p173
      %p176 = scmp.ne.s32.totalorder %s161, %s175
      %p177 = scmp.eq.s32.totalorder %s25, 0
      %p178 = por %p176, %p177
      %s180 = sadd.s32 %s179, 1
      %p183 = scmp.eq.s32.totalorder %s19, 3
      %p184 = scmp.ne.s32.totalorder %s179, %s181
      %p185 = scmp.eq.s32.totalorder %s19, 0
      %p186 = por %p184, %p185
      %p187 = scmp.ne.s32.totalorder %s179, %s181
      %p188 = scmp.eq.s32.totalorder %s24, 3
      %p189 = por %p187, %p188
      %p190 = scmp.ne.s32.totalorder %s181, %s182
      %p191 = scmp.eq.s32.totalorder %s24, 0
      %p192 = por %p190, %p191
      %p193 = scmp.ne.s32.totalorder %s181, %s182
      %p194 = scmp.eq.s32.totalorder %s25, 3
      %p195 = por %p193, %p194
      %p197 = scmp.ne.s32.totalorder %s182, %s196
      %p198 = scmp.eq.s32.totalorder %s25, 0
      %p199 = por %p197, %p198
      %s201 = sadd.s32 %s200, 1
      %p204 = scmp.eq.s32.totalorder %s19, 3
      %p205 = scmp.ne.s32.totalorder %s200, %s202
      %p206 = scmp.eq.s32.totalorder %s19, 0
      %p207 = por %p205, %p206
      %p208 = scmp.ne.s32.totalorder %s200, %s202
      %p209 = scmp.eq.s32.totalorder %s24, 3
      %p210 = por %p208, %p209
      %p211 = scmp.ne.s32.totalorder %s202, %s203
      %p212 = scmp.eq.s32.totalorder %s24, 0
      %p213 = por %p211, %p212
      %p214 = scmp.ne.s32.totalorder %s202, %s203
      %p215 = scmp.eq.s32.totalorder %s25, 3
      %p216 = por %p214, %p215
      %p218 = scmp.ne.s32.totalorder %s203, %s217
      %p219 = scmp.eq.s32.totalorder %s25, 0
      %p220 = por %p218, %p219
      %s222 = sadd.s32 %s221, 1
      %p225 = scmp.eq.s32.totalorder %s19, 3
      %p226 = scmp.ne.s32.totalorder %s221, %s223
      %p227 = scmp.eq.s32.totalorder %s19, 0
      %p228 = por %p226, %p227
      %p229 = scmp.ne.s32.totalorder %s221, %s223
      %p230 = scmp.eq.s32.totalorder %s24, 3
      %p231 = por %p229, %p230
      %p232 = scmp.ne.s32.totalorder %s223, %s224
      %p233 = scmp.eq.s32.totalorder %s24, 0
      %p234 = por %p232, %p233
      %p235 = scmp.ne.s32.totalorder %s223, %s224
      %p236 = scmp.eq.s32.totalorder %s25, 3
      %p237 = por %p235, %p236
      %p239 = scmp.ne.s32.totalorder %s224, %s238
      %p240 = scmp.eq.s32.totalorder %s25, 0
      %p241 = por %p239, %p240
      %s243 = sadd.s32 %s242, 1
      %p246 = scmp.eq.s32.totalorder %s19, 3
      %p247 = scmp.ne.s32.totalorder %s242, %s244
      %p248 = scmp.eq.s32.totalorder %s19, 0
      %p249 = por %p247, %p248
      %p250 = scmp.ne.s32.totalorder %s242, %s244
      %p251 = scmp.eq.s32.totalorder %s24, 3
      %p252 = por %p250, %p251
      %p253 = scmp.ne.s32.totalorder %s244, %s245
      %p254 = scmp.eq.s32.totalorder %s24, 0
      %p255 = por %p253, %p254
      %p256 = scmp.ne.s32.totalorder %s244, %s245
      %p257 = scmp.eq.s32.totalorder %s25, 3
      %p258 = por %p256, %p257
      %p260 = scmp.ne.s32.totalorder %s245, %s259
      %p261 = scmp.eq.s32.totalorder %s25, 0
      %p262 = por %p260, %p261
      %s263 = ssub.s32 %s19, %s26
      %p264 = scmp.eq.s32.totalorder %s263, 0
      %s266 = sadd.s32 %s265, 1
      %s267 = scalar_select %p264, %s265, %s266
      %p270 = pneg %p264
      %p271 = scmp.eq.s32.totalorder %s19, 3
      %p272 = por %p270, %p271
      %p273 = scmp.ne.s32.totalorder %s265, %s268
      %p274 = scmp.eq.s32.totalorder %s19, 0
      %p275 = por %p273, %p274
      %p276 = scmp.ne.s32.totalorder %s265, %s268
      %p277 = scmp.eq.s32.totalorder %s24, 3
      %p278 = por %p276, %p277
      %p279 = scmp.ne.s32.totalorder %s268, %s269
      %p280 = scmp.eq.s32.totalorder %s24, 0
      %p281 = por %p279, %p280
      %p282 = scmp.ne.s32.totalorder %s268, %s269
      %p283 = scmp.eq.s32.totalorder %s25, 3
      %p284 = por %p282, %p283
      %p286 = scmp.ne.s32.totalorder %s269, %s285
      %p287 = scmp.eq.s32.totalorder %s25, 0
      %p288 = por %p286, %p287
      %p289 = scmp.le.s32.totalorder 1, %s19
      %p290 = scmp.lt.s32.totalorder %s19, 5
      %p291 = pnand %p289, %p290
      %p292 = pneg %p291
      // Predicated region
      $region9: #{tpu_custom_call.1} parent=5 // pred_check
        _
      $region10: #{tpu_custom_call.1} parent=5 // pred_check_branch
        %294 = sbr.rel (%p291) target = $region12
      $region11: #{tpu_custom_call.1} parent=5 // pred_region
        %s295 = ssub.s32 %s19, 1
        // Predicated region
        $region13: #{tpu_custom_call.1} parent=11 // pred_check
          %p296 = pneg %p66
        $region14: #{tpu_custom_call.1} parent=11 // pred_check_branch
          %298 = sbr.rel (%p296) target = $region16
        $region15: #{tpu_custom_call.1} parent=11 // pred_region
          _
        $region16: #{tpu_custom_call.1} parent=11 // pred_fallthru
          _
        // Predicated region
        $region17: #{tpu_custom_call.1} parent=11 // pred_check
          %p299 = pneg %p87
        $region18: #{tpu_custom_call.1} parent=11 // pred_check_branch
          %301 = sbr.rel (%p299) target = $region20
        $region19: #{tpu_custom_call.1} parent=11 // pred_region
          _
        $region20: #{tpu_custom_call.1} parent=11 // pred_fallthru
          _
        // Predicated region
        $region21: #{tpu_custom_call.1} parent=11 // pred_check
          %p302 = pneg %p108
        $region22: #{tpu_custom_call.1} parent=11 // pred_check_branch
          %304 = sbr.rel (%p302) target = $region24
        $region23: #{tpu_custom_call.1} parent=11 // pred_region
          _
        $region24: #{tpu_custom_call.1} parent=11 // pred_fallthru
          _
        // Predicated region
        $region25: #{tpu_custom_call.1} parent=11 // pred_check
          %p305 = pneg %p129
        $region26: #{tpu_custom_call.1} parent=11 // pred_check_branch
          %307 = sbr.rel (%p305) target = $region28
        $region27: #{tpu_custom_call.1} parent=11 // pred_region
          _
        $region28: #{tpu_custom_call.1} parent=11 // pred_fallthru
          _
        // Predicated region
        $region29: #{tpu_custom_call.1} parent=11 // pred_check
          %p308 = pneg %p150
        $region30: #{tpu_custom_call.1} parent=11 // pred_check_branch
          %310 = sbr.rel (%p308) target = $region32
        $region31: #{tpu_custom_call.1} parent=11 // pred_region
          %312 = vsyncadd [#allocation3], 0
          %s313 = sshll.u32 %s5, 4
          %s314 = int_to_ptr.hbm [resolvable:$true] %s313
          %s315 = sshll.u32 [#allocation2], 4
          %s316 = int_to_ptr.vmem [resolvable:$true] %s315
          %321 = dma.hbm_to_vmem [thread:$0]  %s314, 2048, %s316, [#allocation3], 128, 128, 8
        $region32: #{tpu_custom_call.1} parent=11 // pred_fallthru
          _
        // Predicated region
        $region33: #{tpu_custom_call.1} parent=11 // pred_check
          %p322 = pneg %p171
        $region34: #{tpu_custom_call.1} parent=11 // pred_check_branch
          %324 = sbr.rel (%p322) target = $region36
        $region35: #{tpu_custom_call.1} parent=11 // pred_region
          _
        $region36: #{tpu_custom_call.1} parent=11 // pred_fallthru
          _
        // Predicated region
        $region37: #{tpu_custom_call.1} parent=11 // pred_check
          %p325 = pneg %p192
        $region38: #{tpu_custom_call.1} parent=11 // pred_check_branch
          %327 = sbr.rel (%p325) target = $region40
        $region39: #{tpu_custom_call.1} parent=11 // pred_region
          %329 = vsyncadd [#allocation5], 0
          %s330 = sshll.u32 %s7, 4
          %s331 = int_to_ptr.hbm [resolvable:$true] %s330
          %s332 = sshll.u32 [#allocation4], 4
          %s333 = int_to_ptr.vmem [resolvable:$true] %s332
          %338 = dma.hbm_to_vmem [thread:$0]  %s331, 2048, %s333, [#allocation5], 128, 128, 8
        $region40: #{tpu_custom_call.1} parent=11 // pred_fallthru
          _
        // Predicated region
        $region41: #{tpu_custom_call.1} parent=11 // pred_check
          %p339 = pneg %p213
        $region42: #{tpu_custom_call.1} parent=11 // pred_check_branch
          %341 = sbr.rel (%p339) target = $region44
        $region43: #{tpu_custom_call.1} parent=11 // pred_region
          _
        $region44: #{tpu_custom_call.1} parent=11 // pred_fallthru
          _
        // Predicated region
        $region45: #{tpu_custom_call.1} parent=11 // pred_check
          %p342 = pneg %p234
        $region46: #{tpu_custom_call.1} parent=11 // pred_check_branch
          %344 = sbr.rel (%p342) target = $region48
        $region47: #{tpu_custom_call.1} parent=11 // pred_region
          _
        $region48: #{tpu_custom_call.1} parent=11 // pred_fallthru
          _
        // Predicated region
        $region49: #{tpu_custom_call.1} parent=11 // pred_check
          %p345 = pneg %p255
        $region50: #{tpu_custom_call.1} parent=11 // pred_check_branch
          %347 = sbr.rel (%p345) target = $region52
        $region51: #{tpu_custom_call.1} parent=11 // pred_region
          _
        $region52: #{tpu_custom_call.1} parent=11 // pred_fallthru
          _
      $region12: #{tpu_custom_call.1} parent=5 // pred_fallthru
        _
      %p348 = scmp.lt.s32.totalorder %s19, 4
      // Predicated region
      $region53: #{tpu_custom_call.1} parent=5 // pred_check
        %p349 = pneg %p348
      $region54: #{tpu_custom_call.1} parent=5 // pred_check_branch
        %351 = sbr.rel (%p349) target = $region56
      $region55: #{tpu_custom_call.1} parent=5 // pred_region
        // Predicated region
        $region57: #{tpu_custom_call.1} parent=55 // pred_check
          %p352 = pneg %p39
        $region58: #{tpu_custom_call.1} parent=55 // pred_check_branch
          %354 = sbr.rel (%p352) target = $region60
        $region59: #{tpu_custom_call.1} parent=55 // pred_region
          %s355 = smul.u32 2, %s19
          %p356 = scmp.lt.s32.totalorder %s355, 7
          %s357 = scalar_select %p356, %s355, 7
          %s358 = smul.addr %s357, 8
          %s359 = scalar_lea.vmem %s0, %s358
          %s360 = smul.u32 2, %s19
        $region60: #{tpu_custom_call.1} parent=55 // pred_fallthru
          _
      $region56: #{tpu_custom_call.1} parent=5 // pred_fallthru
        _
      %p361 = scmp.le.s32.totalorder 1, %s19
      %p362 = scmp.lt.s32.totalorder %s19, 5
      %p363 = pnand %p361, %p362
      %p364 = pneg %p363
      // Predicated region
      $region61: #{tpu_custom_call.1} parent=5 // pred_check
        _
      $region62: #{tpu_custom_call.1} parent=5 // pred_check_branch
        %366 = sbr.rel (%p363) target = $region64
      $region63: #{tpu_custom_call.1} parent=5 // pred_region
        %s367 = ssub.s32 %s19, 1
        // Predicated region
        $region65: #{tpu_custom_call.1} parent=63 // pred_check
          %p368 = pneg %p150
        $region66: #{tpu_custom_call.1} parent=63 // pred_check_branch
          %370 = sbr.rel (%p368) target = $region68
        $region67: #{tpu_custom_call.1} parent=63 // pred_region
          %372 = dma.done [#allocation3], 2048
        $region68: #{tpu_custom_call.1} parent=63 // pred_fallthru
          _
        // Predicated region
        $region69: #{tpu_custom_call.1} parent=63 // pred_check
          %p373 = pneg %p192
        $region70: #{tpu_custom_call.1} parent=63 // pred_check_branch
          %375 = sbr.rel (%p373) target = $region72
        $region71: #{tpu_custom_call.1} parent=63 // pred_region
          %377 = dma.done [#allocation5], 2048
        $region72: #{tpu_custom_call.1} parent=63 // pred_fallthru
          _
        %s378 = smul.u32 2, %s24
        %p379 = scmp.lt.s32.totalorder %s378, 7
        %s380 = scalar_select %p379, %s378, 7
        %s381 = smul.addr %s380, 8
        %s382 = scalar_lea.vmem %s0, %s381
        %p383 = pneg %p45
        %p384 = pneg %p42
        %p385 = pneg %p66
        %p386 = pneg %p63
        %p387 = pneg %p87
        %p388 = pneg %p84
        %p389 = pneg %p108
        %p390 = pneg %p105
        %p391 = pneg %p129
        %p392 = pneg %p126
        %p393 = pneg %p150
        %p394 = pneg %p147
        %p395 = pneg %p171
        %p396 = pneg %p168
        %p397 = pneg %p192
        %p398 = pneg %p189
        %p399 = pneg %p213
        %p400 = pneg %p210
        %p401 = pneg %p234
        %p402 = pneg %p231
        %p403 = pneg %p255
        %p404 = pneg %p252
        %p405 = pneg %p281
        %p406 = pneg %p278
        %s407 = smul.u32 2, %s24
        %p408 = scmp.lt.s32.totalorder %s407, 7
        %s409 = scalar_select %p408, %s407, 7
        %s410 = smul.addr %s409, 8
        %s411 = scalar_lea.vmem %s11, %s410
        %s412 = smul.u32 2, %s24
        %p413 = scmp.lt.s32.totalorder %s412, 7
        %s414 = scalar_select %p413, %s412, 7
        %s415 = smul.addr %s414, 8
        %s416 = scalar_lea.vmem %s0, %s415
        %s417 = smul.u32 2, %s24
        %s418 = smul.u32 2, %s24
        %p419 = scmp.lt.s32.totalorder %s418, 7
        %s420 = scalar_select %p419, %s418, 7
        %s421 = smul.addr %s420, 8
        %s422 = scalar_lea.vmem %s11, %s421
        %s423 = smul.u32 2, %s24
        %v424 = vld [vmem:[%s416] sm:$0xff]
        %v425 = vld [vmem:[%s416 + $0x8] sm:$0xff]
        %v426 = vld [vmem:[%s1] sm:$0xff]
        %v427 = vld [vmem:[%s1 + $0x8] sm:$0xff]
        %v428 = vld [vmem:[%s1 + $0x10] sm:$0xff]
        %v429 = vld [vmem:[%s1 + $0x18] sm:$0xff]
        %v430 = vld [vmem:[%s2] sm:$0x1]
        %v432 = vperm.slane %v430, 0
        %vm434 = vcmask 261120
        %v436 = vsel %vm434, %v424, 0
        %v439 = vsel %vm434, %v425, 0
        %441 = vmatpush.msra.mxu0 0.0
        %442 = vmatpush.msra.mxu0 0.0
        %443 = vmatpush.msra.mxu0 0.0
        %444 = vmatpush.msra.mxu0 0.0
        %445 = vmatpush.msra.mxu0 0.0
        %446 = vmatpush.msra.mxu0 0.0
        %447 = vmatpush.msra.mxu0 0.0
        %448 = vmatpush.msra.mxu0 0.0
        %449 = vmatpush.msra.mxu0 0.0
        %450 = vmatpush.msra.mxu0 0.0
        %451 = vmatpush.msra.mxu0 0.0
        %452 = vmatpush.msra.mxu0 0.0
        %453 = vmatpush.msra.mxu0 %v429
        %454 = vmatpush.msra.mxu0 %v428
        %455 = vmatpush.msra.mxu0 %v427
        %456 = vmatpush.msra.mxu0 %v426
        %457 = vmatmul.f32.gmra.mxu0 %v436
        %v458 = vpop.f32.mrf.mxu0
        %v459 = vadd.f32 %v432, %v458
        %460 = vmatmul.f32.gmra.mxu0 %v439
        %v461 = vpop.f32.mrf.mxu0
        %v462 = vadd.f32 %v432, %v461
        %463 = vdwg.mxu0
        %v464 = vmax.f32 %v459, 0.0
        %v465 = vmax.f32 %v462, 0.0
        %v466 = vld [vmem:[%s3] sm:$0xff]
        %v467 = vld [vmem:[%s3 + $0x8] sm:$0xff]
        %v468 = vld [vmem:[%s3 + $0x10] sm:$0xff]
        %v469 = vld [vmem:[%s3 + $0x18] sm:$0xff]
        %v470 = vld [vmem:[%s3 + $0x20] sm:$0xff]
        %v471 = vld [vmem:[%s3 + $0x28] sm:$0xff]
        %v472 = vld [vmem:[%s3 + $0x30] sm:$0xff]
        %v473 = vld [vmem:[%s3 + $0x38] sm:$0xff]
        %v474 = vld [vmem:[%s3 + $0x40] sm:$0xff]
        %v475 = vld [vmem:[%s3 + $0x48] sm:$0xff]
        %v476 = vld [vmem:[%s3 + $0x50] sm:$0xff]
        %v477 = vld [vmem:[%s3 + $0x58] sm:$0xff]
        %v478 = vld [vmem:[%s3 + $0x60] sm:$0xff]
        %v479 = vld [vmem:[%s3 + $0x68] sm:$0xff]
        %v480 = vld [vmem:[%s3 + $0x70] sm:$0xff]
        %v481 = vld [vmem:[%s3 + $0x78] sm:$0xff]
        %v482 = vld [vmem:[%s4] sm:$0x1]
        %v484 = vperm.slane %v482, 0
        %486 = vmatpush.msra.mxu0 %v481
        %487 = vmatpush.msra.mxu0 %v480
        %488 = vmatpush.msra.mxu0 %v479
        %489 = vmatpush.msra.mxu0 %v478
        %490 = vmatpush.msra.mxu0 %v477
        %491 = vmatpush.msra.mxu0 %v476
        %492 = vmatpush.msra.mxu0 %v475
        %493 = vmatpush.msra.mxu0 %v474
        %494 = vmatpush.msra.mxu0 %v473
        %495 = vmatpush.msra.mxu0 %v472
        %496 = vmatpush.msra.mxu0 %v471
        %497 = vmatpush.msra.mxu0 %v470
        %498 = vmatpush.msra.mxu0 %v469
        %499 = vmatpush.msra.mxu0 %v468
        %500 = vmatpush.msra.mxu0 %v467
        %501 = vmatpush.msra.mxu0 %v466
        %502 = vmatmul.f32.gmra.mxu0 %v464
        %v503 = vpop.f32.mrf.mxu0
        %v504 = vadd.f32 %v484, %v503
        %505 = vmatmul.f32.gmra.mxu0 %v465
        %v506 = vpop.f32.mrf.mxu0
        %v507 = vadd.f32 %v484, %v506
        %508 = vdwg.mxu0
        %v509 = vmax.f32 %v504, 0.0
        %v510 = vmax.f32 %v507, 0.0
        %v511 = vld [vmem:[#allocation2] sm:$0xff]
        %v512 = vld [vmem:[#allocation2 + $0x8] sm:$0xff]
        %v513 = vld [vmem:[#allocation2 + $0x10] sm:$0xff]
        %v514 = vld [vmem:[#allocation2 + $0x18] sm:$0xff]
        %v515 = vld [vmem:[#allocation2 + $0x20] sm:$0xff]
        %v516 = vld [vmem:[#allocation2 + $0x28] sm:$0xff]
        %v517 = vld [vmem:[#allocation2 + $0x30] sm:$0xff]
        %v518 = vld [vmem:[#allocation2 + $0x38] sm:$0xff]
        %v519 = vld [vmem:[#allocation2 + $0x40] sm:$0xff]
        %v520 = vld [vmem:[#allocation2 + $0x48] sm:$0xff]
        %v521 = vld [vmem:[#allocation2 + $0x50] sm:$0xff]
        %v522 = vld [vmem:[#allocation2 + $0x58] sm:$0xff]
        %v523 = vld [vmem:[#allocation2 + $0x60] sm:$0xff]
        %v524 = vld [vmem:[#allocation2 + $0x68] sm:$0xff]
        %v525 = vld [vmem:[#allocation2 + $0x70] sm:$0xff]
        %v526 = vld [vmem:[#allocation2 + $0x78] sm:$0xff]
        %v527 = vld [vmem:[%s6] sm:$0x1]
        %v529 = vperm.slane %v527, 0
        %531 = vmatpush.msra.mxu0 %v526
        %532 = vmatpush.msra.mxu0 %v525
        %533 = vmatpush.msra.mxu0 %v524
        %534 = vmatpush.msra.mxu0 %v523
        %535 = vmatpush.msra.mxu0 %v522
        %536 = vmatpush.msra.mxu0 %v521
        %537 = vmatpush.msra.mxu0 %v520
        %538 = vmatpush.msra.mxu0 %v519
        %539 = vmatpush.msra.mxu0 %v518
        %540 = vmatpush.msra.mxu0 %v517
        %541 = vmatpush.msra.mxu0 %v516
        %542 = vmatpush.msra.mxu0 %v515
        %543 = vmatpush.msra.mxu0 %v514
        %544 = vmatpush.msra.mxu0 %v513
        %545 = vmatpush.msra.mxu0 %v512
        %546 = vmatpush.msra.mxu0 %v511
        %547 = vmatmul.f32.gmra.mxu0 %v509
        %v548 = vpop.f32.mrf.mxu0
        %v549 = vadd.f32 %v529, %v548
        %550 = vmatmul.f32.gmra.mxu0 %v510
        %v551 = vpop.f32.mrf.mxu0
        %v552 = vadd.f32 %v529, %v551
        %553 = vdwg.mxu0
        %v554 = vmax.f32 %v549, 0.0
        %v555 = vmax.f32 %v552, 0.0
        %v556 = vld [vmem:[#allocation4] sm:$0xff]
        %v557 = vld [vmem:[#allocation4 + $0x8] sm:$0xff]
        %v558 = vld [vmem:[#allocation4 + $0x10] sm:$0xff]
        %v559 = vld [vmem:[#allocation4 + $0x18] sm:$0xff]
        %v560 = vld [vmem:[#allocation4 + $0x20] sm:$0xff]
        %v561 = vld [vmem:[#allocation4 + $0x28] sm:$0xff]
        %v562 = vld [vmem:[#allocation4 + $0x30] sm:$0xff]
        %v563 = vld [vmem:[#allocation4 + $0x38] sm:$0xff]
        %v564 = vld [vmem:[#allocation4 + $0x40] sm:$0xff]
        %v565 = vld [vmem:[#allocation4 + $0x48] sm:$0xff]
        %v566 = vld [vmem:[#allocation4 + $0x50] sm:$0xff]
        %v567 = vld [vmem:[#allocation4 + $0x58] sm:$0xff]
        %v568 = vld [vmem:[#allocation4 + $0x60] sm:$0xff]
        %v569 = vld [vmem:[#allocation4 + $0x68] sm:$0xff]
        %v570 = vld [vmem:[#allocation4 + $0x70] sm:$0xff]
        %v571 = vld [vmem:[#allocation4 + $0x78] sm:$0xff]
        %v572 = vld [vmem:[%s8] sm:$0x1]
        %v574 = vperm.slane %v572, 0
        %576 = vmatpush.msra.mxu0 %v571
        %577 = vmatpush.msra.mxu0 %v570
        %578 = vmatpush.msra.mxu0 %v569
        %579 = vmatpush.msra.mxu0 %v568
        %580 = vmatpush.msra.mxu0 %v567
        %581 = vmatpush.msra.mxu0 %v566
        %582 = vmatpush.msra.mxu0 %v565
        %583 = vmatpush.msra.mxu0 %v564
        %584 = vmatpush.msra.mxu0 %v563
        %585 = vmatpush.msra.mxu0 %v562
        %586 = vmatpush.msra.mxu0 %v561
        %587 = vmatpush.msra.mxu0 %v560
        %588 = vmatpush.msra.mxu0 %v559
        %589 = vmatpush.msra.mxu0 %v558
        %590 = vmatpush.msra.mxu0 %v557
        %591 = vmatpush.msra.mxu0 %v556
        %592 = vmatmul.f32.gmra.mxu0 %v554
        %v593 = vpop.f32.mrf.mxu0
        %v594 = vadd.f32 %v574, %v593
        %595 = vmatmul.f32.gmra.mxu0 %v555
        %v596 = vpop.f32.mrf.mxu0
        %v597 = vadd.f32 %v574, %v596
        %598 = vdwg.mxu0
        %v599 = vmax.f32 %v594, 0.0
        %v600 = vmax.f32 %v597, 0.0
        %v601 = vld [vmem:[%s9] sm:$0xff]
        %v602 = vld [vmem:[%s9 + $0x8] sm:$0xff]
        %v603 = vld [vmem:[%s9 + $0x10] sm:$0xff]
        %v604 = vld [vmem:[%s9 + $0x18] sm:$0xff]
        %v605 = vld [vmem:[%s9 + $0x20] sm:$0xff]
        %v606 = vld [vmem:[%s9 + $0x28] sm:$0xff]
        %v607 = vld [vmem:[%s9 + $0x30] sm:$0xff]
        %v608 = vld [vmem:[%s9 + $0x38] sm:$0xff]
        %v609 = vld [vmem:[%s9 + $0x40] sm:$0xff]
        %v610 = vld [vmem:[%s9 + $0x48] sm:$0xff]
        %v611 = vld [vmem:[%s9 + $0x50] sm:$0xff]
        %v612 = vld [vmem:[%s9 + $0x58] sm:$0xff]
        %v613 = vld [vmem:[%s9 + $0x60] sm:$0xff]
        %v614 = vld [vmem:[%s9 + $0x68] sm:$0xff]
        %v615 = vld [vmem:[%s9 + $0x70] sm:$0xff]
        %v616 = vld [vmem:[%s9 + $0x78] sm:$0xff]
        %v617 = vld [vmem:[%s10] sm:$0x1]
        %v619 = vperm.slane %v617, 0
        %621 = vmatpush.msra.mxu0 %v616
        %622 = vmatpush.msra.mxu0 %v615
        %623 = vmatpush.msra.mxu0 %v614
        %624 = vmatpush.msra.mxu0 %v613
        %625 = vmatpush.msra.mxu0 %v612
        %626 = vmatpush.msra.mxu0 %v611
        %627 = vmatpush.msra.mxu0 %v610
        %628 = vmatpush.msra.mxu0 %v609
        %629 = vmatpush.msra.mxu0 %v608
        %630 = vmatpush.msra.mxu0 %v607
        %631 = vmatpush.msra.mxu0 %v606
        %632 = vmatpush.msra.mxu0 %v605
        %633 = vmatpush.msra.mxu0 %v604
        %634 = vmatpush.msra.mxu0 %v603
        %635 = vmatpush.msra.mxu0 %v602
        %636 = vmatpush.msra.mxu0 %v601
        %637 = vmatmul.f32.gmra.mxu0 %v599
        %v638 = vpop.f32.mrf.mxu0
        %v639 = vadd.f32 %v619, %v638
        %640 = vmatmul.f32.gmra.mxu0 %v600
        %v641 = vpop.f32.mrf.mxu0
        %v642 = vadd.f32 %v619, %v641
        %643 = vdwg.mxu0
        %vm644 = vcmask 64512
        %v645 = vsel %vm644, %v639, -inf
        %646 = vmax.xlane.f32.xlu0 %v645
        %v647 = vpop.xlane.xlu0 %646
        %v648 = vsel %vm644, %v642, -inf
        %649 = vmax.xlane.f32.xlu0 %v648
        %v650 = vpop.xlane.xlu0 %649
        %v651 = vsub.f32 %v639, %v647
        %v652 = vsub.f32 %v642, %v650
        %v653 = vmul.f32 %v651, 1.442695
        %v654 = vpow.pop %v653
        %v655 = vmul.f32 %v652, 1.442695
        %v656 = vpow.pop %v655
        %v657 = vsel %vm644, %v654, 0.0
        %658 = vadd.xlane.f32.xlu0 %v657
        %v659 = vpop.xlane.xlu0 %658
        %v660 = vsel %vm644, %v656, 0.0
        %661 = vadd.xlane.f32.xlu0 %v660
        %v662 = vpop.xlane.xlu0 %661
        %v663 = vrcp.pop %v659
        %v664 = vmul.f32 %v659, %v663
        %v665 = vsub.f32 1.0, %v664
        %v666 = vmul.f32 %v663, %v665
        %v667 = vadd.f32 %v663, %v666
        %vm668 = vweird.f32 %v659
        %vm669 = vweird.f32 %v663
        %vm670 = vmor %vm668, %vm669
        %v671 = vsel %vm670, %v663, %v667
        %v672 = vand.u32 2147483647, %v659
        %vm673 = vcmp.eq.f32.partialorder %v672, 8.507059e+37
        %v674 = vand.u32 %v659, 2147483648
        %v675 = vor.u32 1.1754944e-38, %v674
        %v676 = vsel %vm673, %v675, %v671
        %v677 = vmul.f32 %v654, %v676
        %v678 = vrcp.pop %v662
        %v679 = vmul.f32 %v662, %v678
        %v680 = vsub.f32 1.0, %v679
        %v681 = vmul.f32 %v678, %v680
        %v682 = vadd.f32 %v678, %v681
        %vm683 = vweird.f32 %v662
        %vm684 = vweird.f32 %v678
        %vm685 = vmor %vm683, %vm684
        %v686 = vsel %vm685, %v678, %v682
        %v687 = vand.u32 2147483647, %v662
        %vm688 = vcmp.eq.f32.partialorder %v687, 8.507059e+37
        %v689 = vand.u32 %v662, 2147483648
        %v690 = vor.u32 1.1754944e-38, %v689
        %v691 = vsel %vm688, %v690, %v686
        %v692 = vmul.f32 %v656, %v691
        %693 = vst.msk [vmem:[%s422] sm:$0xff] %vm644, %v677
        %694 = vst.msk [vmem:[%s422 + $0x8] sm:$0xff] %vm644, %v692
        %s695 = smul.u32 2, %s24
        %p696 = scmp.lt.s32.totalorder %s695, 7
        %s697 = scalar_select %p696, %s695, 7
        %s698 = smul.addr %s697, 8
        %s699 = scalar_lea.vmem %s11, %s698
        // Predicated region
        $region73: #{tpu_custom_call.1} parent=63 // pred_check
          %p700 = pneg %p278
        $region74: #{tpu_custom_call.1} parent=63 // pred_check_branch
          %702 = sbr.rel (%p700) target = $region76
        $region75: #{tpu_custom_call.1} parent=63 // pred_region
          %s703 = smul.u32 2, %s24
        $region76: #{tpu_custom_call.1} parent=63 // pred_fallthru
          _
      $region64: #{tpu_custom_call.1} parent=5 // pred_fallthru
        _
      %p704 = scmp.le.s32.totalorder 2, %s19
      // Predicated region
      $region77: #{tpu_custom_call.1} parent=5 // pred_check
        %p705 = pneg %p704
      $region78: #{tpu_custom_call.1} parent=5 // pred_check_branch
        %707 = sbr.rel (%p705) target = $region80
      $region79: #{tpu_custom_call.1} parent=5 // pred_region
        %s708 = ssub.s32 %s19, 2
        // Predicated region
        $region81: #{tpu_custom_call.1} parent=79 // pred_check
          %p709 = pneg %p284
        $region82: #{tpu_custom_call.1} parent=79 // pred_check_branch
          %711 = sbr.rel (%p709) target = $region84
        $region83: #{tpu_custom_call.1} parent=79 // pred_region
          %s712 = smul.u32 2, %s25
          %p713 = scmp.lt.s32.totalorder %s712, 7
          %s714 = scalar_select %p713, %s712, 7
          %s715 = smul.addr %s714, 8
          %s716 = scalar_lea.vmem %s11, %s715
        $region84: #{tpu_custom_call.1} parent=79 // pred_fallthru
          _
      $region80: #{tpu_custom_call.1} parent=5 // pred_fallthru
        _
    $region6: #{tpu_custom_call.1} parent=1 // loop_footer
      %s23 = sadd.s32 1, %s19
    $region7: #{tpu_custom_call.1} parent=1 // loop_footer_branch
      %18 = sbr.rel target = $region3
    $region8: #{tpu_custom_call.1} parent=1 // loop_exit
      _
    %717 = vsyncpa [#allocation3], 1
    %s718 = scalar_lea.sflag [#allocation3], 1
    %719 = vsyncpa %s718, 1
    %720 = vsyncpa [#allocation5], 1

</llo_original>
